<compile_context>
chip_gen: v7x
topology: tpu7x:2x2x1
jax: 0.10.0
libtpu: 0.0.40
codegen_flags: <defaults>
</compile_context>

<pallas_src>
import functools

import jax
import jax.numpy as jnp
from jax.experimental import pallas as pl
from jax.experimental.pallas import tpu as pltpu


def _round_up(x, m):
    return ((x + m - 1) // m) * m


def _sublane_tile(itemsize):
    # Second-minor layout tile: 8 rows for 4-byte dtypes, 16 for 2-byte, 32 for 1-byte.
    return max(8, 32 // max(1, itemsize))


def _vmem_capacity_bytes():
    """Best-effort per-core VMEM capacity; conservative (v7x) fallback."""
    try:
        info = pltpu.get_tpu_info()
        for attr in ("vmem_capacity_bytes", "vmem_bytes"):
            cap = getattr(info, attr, None)
            if cap:
                return int(cap)
    except Exception:
        pass
    return 64 * 1024 * 1024


def _prompt_assemble_kernel(shared_neg_suffix, c_blk, n_ctx, *refs):
    """Assemble [prefix | ctx | suffix] for a block of c_blk classes.

    Ref shapes:
      prefix_ref   : (n_cls, D)         (resident, constant index_map)
      ctx_*_ref    : (n_ctx, D)         (resident, shared across classes)
      suffix_*_ref : (c_blk, L_suf, D)  (blocked over classes)
      out_*_ref    : (c_blk, T, D)      with T = 1 + n_ctx + L_suf
    """
    if shared_neg_suffix:
        (prefix_ref, ctx_ref, ctx_pos_ref, ctx_neg_ref, suffix_ref,
         out_ref, out_pos_ref, out_neg_ref) = refs
        suffix_neg_ref = None
    else:
        (prefix_ref, ctx_ref, ctx_pos_ref, ctx_neg_ref, suffix_ref,
         suffix_neg_ref, out_ref, out_pos_ref, out_neg_ref) = refs

    d = prefix_ref.shape[-1]
    start = pl.multiple_of(pl.program_id(0) * c_blk, c_blk)

    # ---- row 0: per-class SOS (prefix) token -------------------------------
    pre = prefix_ref[pl.ds(start, c_blk), :]          # (c_blk, D), dense slice of resident prefix
    pre3 = pre[:, None, :]                            # (c_blk, 1, D)
    out_ref[:, 0:1, :] = pre3.astype(out_ref.dtype)
    out_pos_ref[:, 0:1, :] = pre3.astype(out_pos_ref.dtype)
    out_neg_ref[:, 0:1, :] = pre3.astype(out_neg_ref.dtype)

    # ---- rows 1 .. 1+n_ctx: learned context, broadcast over the class block --
    def put_ctx(o_ref, ctx2d_ref):
        ctx_b = jnp.broadcast_to(ctx2d_ref[...][None, :, :], (c_blk, n_ctx, d))
        o_ref[:, 1:1 + n_ctx, :] = ctx_b.astype(o_ref.dtype)

    put_ctx(out_ref, ctx_ref)
    put_ctx(out_pos_ref, ctx_pos_ref)
    put_ctx(out_neg_ref, ctx_neg_ref)

    # ---- rows 1+n_ctx .. T: class-name + EOS + padding suffix ----------------
    suf = suffix_ref[...]                             # loaded once, stored to all outputs
    out_ref[:, 1 + n_ctx:, :] = suf.astype(out_ref.dtype)
    out_pos_ref[:, 1 + n_ctx:, :] = suf.astype(out_pos_ref.dtype)
    neg_suf = suf if shared_neg_suffix else suffix_neg_ref[...]
    out_neg_ref[:, 1 + n_ctx:, :] = neg_suf.astype(out_neg_ref.dtype)


def assemble_prompts(prefix, ctx, ctx_pos, ctx_neg, suffix,
                     suffix_neg=None, out_dtype=None, class_block=None):
    """Pallas-backed equivalent of the 'end' branch of PromptLearner.forward.

    prefix:     (n_cls, 1, D)
    ctx_*:      (n_ctx, D)            generic (non class-specific) context
    suffix:     (n_cls, L_suf, D)
    suffix_neg: optional (n_cls, L_suf, D); if None, `suffix` is reused for the
                negative prompts (neg_prompt_wcls=True path) and only DMA'd once.
    Returns three (n_cls, 1 + n_ctx + L_suf, D) arrays.
    """
    n_cls = prefix.shape[0]
    D = prefix.shape[-1]
    n_ctx = ctx.shape[0]
    l_suf = suffix.shape[1]
    T = 1 + n_ctx + l_suf
    shared = suffix_neg is None
    out_dt = out_dtype if out_dtype is not None else prefix.dtype

    in_item = jnp.dtype(suffix.dtype).itemsize
    out_item = jnp.dtype(out_dt).itemsize
    t_in = _sublane_tile(in_item)
    t_out = _sublane_tile(out_item)

    # Dense 2-D prefix: one contiguous DMA, 1/8 the VMEM of a (·, 1, D) block.
    prefix2d = prefix.reshape(n_cls, D)

    # ---- generation-aware VMEM budget ---------------------------------------
    vmem_cap = _vmem_capacity_bytes()
    big_vmem = vmem_cap >= 96 * 1024 * 1024          # v5e / v6e (128 MiB VMEM)
    if big_vmem:
        budget = int(vmem_cap * 0.75)                 # ~96 MiB on 128 MiB parts
    else:
        budget = min(40 * 1024 * 1024, int(vmem_cap * 0.625))   # ~40 MiB on v7x
    prefer_multi_step = not big_vmem                  # 64 MiB parts have 2 TensorCores

    def vmem_estimate(cb):
        # Resident (constant index_map) inputs — fetched once, double-buffered.
        resident = (_round_up(n_cls, t_in) * D * in_item
                    + 3 * _round_up(n_ctx, t_in) * D * in_item)
        # Per-block pipelined inputs / outputs (rows rounded to the layout tile).
        suf_blk = cb * _round_up(l_suf, t_in) * D * in_item * (1 if shared else 2)
        out_blk = 3 * cb * _round_up(T, t_out) * D * out_item
        # In-kernel temporaries that may spill to VMEM (suffix value, ctx broadcast,
        # prefix row relayout).
        temps = (cb * _round_up(l_suf, t_in) * D * in_item
                 + cb * _round_up(n_ctx, t_out) * D * out_item
                 + cb * 8 * D * out_item)
        return 2 * (resident + suf_blk + out_blk) + temps

    # ---- choose c_blk as a divisor of n_cls (no padding, no output slice) ----
    divisors = [d for d in range(n_cls, 0, -1) if n_cls % d == 0]
    if class_block is not None:
        capped = [d for d in divisors if d <= max(1, class_block)]
        divisors = capped or [1]
    fitting = [d for d in divisors if vmem_estimate(d) <= budget] or [divisors[-1]]
    c_blk = fitting[0]
    if prefer_multi_step:
        # Keep the grid >= 2 steps and even so the "parallel" class axis can be
        # sharded across both TensorCores on 2-core chips.
        multi = [d for d in fitting if (n_cls // d) >= 2 and (n_cls // d) % 2 == 0]
        if multi:
            c_blk = multi[0]
    grid = (n_cls // c_blk,)

    # ---- specs ---------------------------------------------------------------
    args = [prefix2d, ctx, ctx_pos, ctx_neg, suffix]
    in_specs = [
        pl.BlockSpec((n_cls, D), lambda i: (0, 0)),            # prefix (resident)
        pl.BlockSpec((n_ctx, D), lambda i: (0, 0)),            # ctx (resident)
        pl.BlockSpec((n_ctx, D), lambda i: (0, 0)),            # ctx_pos
        pl.BlockSpec((n_ctx, D), lambda i: (0, 0)),            # ctx_neg
        pl.BlockSpec((c_blk, l_suf, D), lambda i: (i, 0, 0)),  # suffix (blocked)
    ]
    if not shared:
        args.append(suffix_neg)
        in_specs.append(pl.BlockSpec((c_blk, l_suf, D), lambda i: (i, 0, 0)))

    out_shape = [jax.ShapeDtypeStruct((n_cls, T, D), out_dt)] * 3
    out_specs = [pl.BlockSpec((c_blk, T, D), lambda i: (i, 0, 0))] * 3

    # ---- accurate memory-bound cost hint for XLA ----------------------------
    read_bytes = (n_cls * D + 3 * n_ctx * D
                  + n_cls * l_suf * D * (1 if shared else 2)) * in_item
    write_bytes = 3 * n_cls * T * D * out_item
    cost = pl.CostEstimate(flops=0, transcendentals=0,
                           bytes_accessed=int(read_bytes + write_bytes))

    est = vmem_estimate(c_blk)
    # Uncapped on 128 MiB parts (leave a small headroom below physical capacity).
    vmem_limit = int(min(max(32 * 1024 * 1024, vmem_cap - 4 * 1024 * 1024),
                         max(32 * 1024 * 1024, int(1.5 * est))))

    kernel = functools.partial(_prompt_assemble_kernel, shared, c_blk, n_ctx)
    outs = pl.pallas_call(
        kernel,
        out_shape=out_shape,
        grid_spec=pltpu.PrefetchScalarGridSpec(
            num_scalar_prefetch=0,
            grid=grid,
            in_specs=in_specs,
            out_specs=out_specs,
        ),
        compiler_params=pltpu.CompilerParams(
            dimension_semantics=("parallel",),
            vmem_limit_bytes=vmem_limit),
        cost_estimate=cost,
    )(*args)
    return tuple(outs)


class PromptLearnerPallas:
    """JAX/Pallas re-implementation of PromptLearner (generic context, 'end' position)."""

    def __init__(self, key, n_cls, n_ctx, ctx_dim, seq_len, dtype=jnp.float32):
        k_ctx, k_pos, k_neg, k_emb, k_emb_nc = jax.random.split(key, 5)

        # nn.init.normal_(ctx_vectors, std=0.02)  -- generic (CSC=False) context
        self.ctx = (0.02 * jax.random.normal(k_ctx, (n_ctx, ctx_dim))).astype(dtype)
        self.ctx_pos = (0.02 * jax.random.normal(k_pos, (n_ctx, ctx_dim))).astype(dtype)
        self.ctx_neg = (0.02 * jax.random.normal(k_neg, (n_ctx, ctx_dim))).astype(dtype)

        self.temperature = jnp.asarray(3.91, dtype=dtype)
        self.spatial_T = jnp.asarray(3.0, dtype=dtype)

        # Stand-in for clip_model.token_embedding(tokenized_prompts):
        # deterministic synthetic embeddings of shape (n_cls, seq_len, ctx_dim).
        embedding = (0.01 * jax.random.normal(
            k_emb, (n_cls, seq_len, ctx_dim))).astype(dtype)
        embedding_nocls = (0.01 * jax.random.normal(
            k_emb_nc, (n_cls, seq_len, ctx_dim))).astype(dtype)

        self.token_prefix = embedding[:, :1, :]                 # SOS token
        self.token_suffix = embedding[:, 1 + n_ctx:, :]         # CLS word + EOS + pads
        self.token_suffix_nocls = embedding_nocls[:, 1 + n_ctx:, :]

        self.n_cls = n_cls
        self.n_ctx = n_ctx
        self.class_token_position = "end"
        # TODO(synk): 'middle' / 'front' class-token positions require per-class
        # ragged slicing by name_lens (data-dependent concat); not implemented.

    def __call__(self, neg_prompt_wcls=True):
        assert self.class_token_position == "end"
        # When neg_prompt_wcls=True, reuse the same suffix input inside the
        # kernel instead of DMA'ing it twice.
        suffix_neg = None if neg_prompt_wcls else self.token_suffix_nocls
        prompts, prompts_pos, prompts_neg = assemble_prompts(
            self.token_prefix, self.ctx, self.ctx_pos, self.ctx_neg,
            self.token_suffix, suffix_neg)
        return prompts, prompts_pos, prompts_neg, self.temperature, self.spatial_T


def _reference_forward(pl_module, neg_prompt_wcls=True):
    """Pure-JAX reference mirroring the PyTorch forward exactly."""
    n_cls = pl_module.n_cls
    ctx = jnp.broadcast_to(pl_module.ctx[None], (n_cls,) + pl_module.ctx.shape)
    ctx_pos = jnp.broadcast_to(pl_module.ctx_pos[None], (n_cls,) + pl_module.ctx_pos.shape)
    ctx_neg = jnp.broadcast_to(pl_module.ctx_neg[None], (n_cls,) + pl_module.ctx_neg.shape)
    prefix, suffix = pl_module.token_prefix, pl_module.token_suffix
    suffix_neg = suffix if neg_prompt_wcls else pl_module.token_suffix_nocls
    prompts = jnp.concatenate([prefix, ctx, suffix], axis=1)
    prompts_pos = jnp.concatenate([prefix, ctx_pos, suffix], axis=1)
    prompts_neg = jnp.concatenate([prefix, ctx_neg, suffix_neg], axis=1)
    return prompts, prompts_pos, prompts_neg


if __name__ == "__main__":
    # Small shapes consistent with the module: n_cls classes, n_ctx learned
    # context tokens, sequence length seq_len, context/embedding dim ctx_dim.
    n_cls, n_ctx, seq_len, ctx_dim = 4, 4, 16, 128

    key = jax.random.PRNGKey(0)
    learner = PromptLearnerPallas(key, n_cls, n_ctx, ctx_dim, seq_len)

    prompts, prompts_pos, prompts_neg, temperature, spatial_T = learner(
        neg_prompt_wcls=True)
    jax.block_until_ready((prompts, prompts_pos, prompts_neg))

    # Verify against pure-JAX reference.
    ref_p, ref_pp, ref_pn = _reference_forward(learner, neg_prompt_wcls=True)
    assert prompts.shape == (n_cls, seq_len, ctx_dim)
    assert jnp.allclose(prompts, ref_p)
    assert jnp.allclose(prompts_pos, ref_pp)
    assert jnp.allclose(prompts_neg, ref_pn)

    # Also exercise the neg_prompt_wcls=False path (distinct suffix_nocls input).
    _, _, prompts_neg2, _, _ = learner(neg_prompt_wcls=False)
    jax.block_until_ready(prompts_neg2)
    _, _, ref_pn2 = _reference_forward(learner, neg_prompt_wcls=False)
    assert jnp.allclose(prompts_neg2, ref_pn2)

    # Exercise a multi-step grid explicitly (c_blk forced below n_cls).
    p_multi, pp_multi, pn_multi = assemble_prompts(
        learner.token_prefix, learner.ctx, learner.ctx_pos, learner.ctx_neg,
        learner.token_suffix, None, class_block=2)
    jax.block_until_ready((p_multi, pp_multi, pn_multi))
    assert jnp.allclose(p_multi, ref_p)
    assert jnp.allclose(pp_multi, ref_pp)
    assert jnp.allclose(pn_multi, ref_pn)

    # Scalar parameters pass through unchanged (compare with f32 tolerance).
    assert abs(float(temperature) - 3.91) < 1e-5
    assert abs(float(spatial_T) - 3.0) < 1e-6

    print("KERNEL_OK")
</pallas_src>

<mosaic_0001>
module attributes {stable_mosaic.version = 11 : i64} {
  func.func @_prompt_assemble_kernel(%arg0: i32, %arg1: memref<4x128xf32, #tpu.memory_space<vmem>>, %arg2: memref<4x128xf32, #tpu.memory_space<vmem>>, %arg3: memref<4x128xf32, #tpu.memory_space<vmem>>, %arg4: memref<4x128xf32, #tpu.memory_space<vmem>>, %arg5: memref<2x11x128xf32, #tpu.memory_space<vmem>>, %arg6: memref<2x16x128xf32, #tpu.memory_space<vmem>>, %arg7: memref<2x16x128xf32, #tpu.memory_space<vmem>>, %arg8: memref<2x16x128xf32, #tpu.memory_space<vmem>>) attributes {dimension_semantics = [#tpu.dimension_semantics<parallel>], iteration_bounds = array<i64: 2>, scalar_prefetch = 0 : i64, scratch_operands = 0 : i64, tpu.core_type = #tpu.core_type<tc>, window_params = [{pipeline_mode = #tpu.pipeline_mode<synchronous>, transform_indices = @transform_0, window_bounds = array<i64: 4, 128>}, {pipeline_mode = #tpu.pipeline_mode<synchronous>, transform_indices = @transform_1, window_bounds = array<i64: 4, 128>}, {pipeline_mode = #tpu.pipeline_mode<synchronous>, transform_indices = @transform_2, window_bounds = array<i64: 4, 128>}, {pipeline_mode = #tpu.pipeline_mode<synchronous>, transform_indices = @transform_3, window_bounds = array<i64: 4, 128>}, {transform_indices = @transform_4, window_bounds = array<i64: 2, 11, 128>}, {transform_indices = @transform_5, window_bounds = array<i64: 2, 16, 128>}, {transform_indices = @transform_6, window_bounds = array<i64: 2, 16, 128>}, {transform_indices = @transform_7, window_bounds = array<i64: 2, 16, 128>}]} {
    %c2_i32 = arith.constant 2 : i32
    %0 = arith.muli %arg0, %c2_i32 : i32
    %1 = tpu.assume_multiple %0, 2 : i32
    %2 = arith.index_cast %1 : i32 to index
    %c0 = arith.constant 0 : index
    %3 = vector.load %arg1[%2, %c0] : memref<4x128xf32, #tpu.memory_space<vmem>>, vector<2x128xf32>
    %4 = vector.shape_cast %3 : vector<2x128xf32> to vector<2x1x128xf32>
    %c0_0 = arith.constant 0 : index
    %c0_1 = arith.constant 0 : index
    %c0_2 = arith.constant 0 : index
    %5 = vector.load %arg6[%c0_0, %c0_1, %c0_2] : memref<2x16x128xf32, #tpu.memory_space<vmem>>, vector<2x1x128xf32>
    tpu.vector_store %arg6[%c0_0, %c0_1, %c0_2], %4 {strides = array<i32>} : memref<2x16x128xf32, #tpu.memory_space<vmem>>, vector<2x1x128xf32>,
    %c0_3 = arith.constant 0 : index
    %c0_4 = arith.constant 0 : index
    %c0_5 = arith.constant 0 : index
    %6 = vector.load %arg7[%c0_3, %c0_4, %c0_5] : memref<2x16x128xf32, #tpu.memory_space<vmem>>, vector<2x1x128xf32>
    tpu.vector_store %arg7[%c0_3, %c0_4, %c0_5], %4 {strides = array<i32>} : memref<2x16x128xf32, #tpu.memory_space<vmem>>, vector<2x1x128xf32>,
    %c0_6 = arith.constant 0 : index
    %c0_7 = arith.constant 0 : index
    %c0_8 = arith.constant 0 : index
    %7 = vector.load %arg8[%c0_6, %c0_7, %c0_8] : memref<2x16x128xf32, #tpu.memory_space<vmem>>, vector<2x1x128xf32>
    tpu.vector_store %arg8[%c0_6, %c0_7, %c0_8], %4 {strides = array<i32>} : memref<2x16x128xf32, #tpu.memory_space<vmem>>, vector<2x1x128xf32>,
    %c0_9 = arith.constant 0 : index
    %c0_10 = arith.constant 0 : index
    %8 = vector.load %arg2[%c0_9, %c0_10] : memref<4x128xf32, #tpu.memory_space<vmem>>, vector<4x128xf32>
    %9 = vector.shape_cast %8 : vector<4x128xf32> to vector<1x4x128xf32>
    %10 = vector.shape_cast %9 : vector<1x4x128xf32> to vector<1x4x128xf32>
    %11 = vector.broadcast %10 : vector<1x4x128xf32> to vector<2x4x128xf32>
    %c0_11 = arith.constant 0 : index
    %c1 = arith.constant 1 : index
    %c0_12 = arith.constant 0 : index
    %12 = vector.load %arg6[%c0_11, %c1, %c0_12] : memref<2x16x128xf32, #tpu.memory_space<vmem>>, vector<2x4x128xf32>
    tpu.vector_store %arg6[%c0_11, %c1, %c0_12], %11 {strides = array<i32>} : memref<2x16x128xf32, #tpu.memory_space<vmem>>, vector<2x4x128xf32>,
    %c0_13 = arith.constant 0 : index
    %c0_14 = arith.constant 0 : index
    %13 = vector.load %arg3[%c0_13, %c0_14] : memref<4x128xf32, #tpu.memory_space<vmem>>, vector<4x128xf32>
    %14 = vector.shape_cast %13 : vector<4x128xf32> to vector<1x4x128xf32>
    %15 = vector.shape_cast %14 : vector<1x4x128xf32> to vector<1x4x128xf32>
    %16 = vector.broadcast %15 : vector<1x4x128xf32> to vector<2x4x128xf32>
    %c0_15 = arith.constant 0 : index
    %c1_16 = arith.constant 1 : index
    %c0_17 = arith.constant 0 : index
    %17 = vector.load %arg7[%c0_15, %c1_16, %c0_17] : memref<2x16x128xf32, #tpu.memory_space<vmem>>, vector<2x4x128xf32>
    tpu.vector_store %arg7[%c0_15, %c1_16, %c0_17], %16 {strides = array<i32>} : memref<2x16x128xf32, #tpu.memory_space<vmem>>, vector<2x4x128xf32>,
    %c0_18 = arith.constant 0 : index
    %c0_19 = arith.constant 0 : index
    %18 = vector.load %arg4[%c0_18, %c0_19] : memref<4x128xf32, #tpu.memory_space<vmem>>, vector<4x128xf32>
    %19 = vector.shape_cast %18 : vector<4x128xf32> to vector<1x4x128xf32>
    %20 = vector.shape_cast %19 : vector<1x4x128xf32> to vector<1x4x128xf32>
    %21 = vector.broadcast %20 : vector<1x4x128xf32> to vector<2x4x128xf32>
    %c0_20 = arith.constant 0 : index
    %c1_21 = arith.constant 1 : index
    %c0_22 = arith.constant 0 : index
    %22 = vector.load %arg8[%c0_20, %c1_21, %c0_22] : memref<2x16x128xf32, #tpu.memory_space<vmem>>, vector<2x4x128xf32>
    tpu.vector_store %arg8[%c0_20, %c1_21, %c0_22], %21 {strides = array<i32>} : memref<2x16x128xf32, #tpu.memory_space<vmem>>, vector<2x4x128xf32>,
    %c0_23 = arith.constant 0 : index
    %c0_24 = arith.constant 0 : index
    %c0_25 = arith.constant 0 : index
    %23 = vector.load %arg5[%c0_23, %c0_24, %c0_25] : memref<2x11x128xf32, #tpu.memory_space<vmem>>, vector<2x11x128xf32>
    %c0_26 = arith.constant 0 : index
    %c5 = arith.constant 5 : index
    %c0_27 = arith.constant 0 : index
    %24 = vector.load %arg6[%c0_26, %c5, %c0_27] : memref<2x16x128xf32, #tpu.memory_space<vmem>>, vector<2x11x128xf32>
    tpu.vector_store %arg6[%c0_26, %c5, %c0_27], %23 {strides = array<i32>} : memref<2x16x128xf32, #tpu.memory_space<vmem>>, vector<2x11x128xf32>,
    %c0_28 = arith.constant 0 : index
    %c5_29 = arith.constant 5 : index
    %c0_30 = arith.constant 0 : index
    %25 = vector.load %arg7[%c0_28, %c5_29, %c0_30] : memref<2x16x128xf32, #tpu.memory_space<vmem>>, vector<2x11x128xf32>
    tpu.vector_store %arg7[%c0_28, %c5_29, %c0_30], %23 {strides = array<i32>} : memref<2x16x128xf32, #tpu.memory_space<vmem>>, vector<2x11x128xf32>,
    %c0_31 = arith.constant 0 : index
    %c5_32 = arith.constant 5 : index
    %c0_33 = arith.constant 0 : index
    %26 = vector.load %arg8[%c0_31, %c5_32, %c0_33] : memref<2x16x128xf32, #tpu.memory_space<vmem>>, vector<2x11x128xf32>
    tpu.vector_store %arg8[%c0_31, %c5_32, %c0_33], %23 {strides = array<i32>} : memref<2x16x128xf32, #tpu.memory_space<vmem>>, vector<2x11x128xf32>,
    return
  }
  func.func @transform_0(%arg0: i32) -> (i32, i32) {
    %c0_i32 = arith.constant 0 : i32
    %c0_i32_0 = arith.constant 0 : i32
    %c0_i32_1 = arith.constant 0 : i32
    return %c0_i32, %c0_i32_0 : i32, i32
  }
  func.func @transform_1(%arg0: i32) -> (i32, i32) {
    %c0_i32 = arith.constant 0 : i32
    %c0_i32_0 = arith.constant 0 : i32
    %c0_i32_1 = arith.constant 0 : i32
    return %c0_i32, %c0_i32_0 : i32, i32
  }
  func.func @transform_2(%arg0: i32) -> (i32, i32) {
    %c0_i32 = arith.constant 0 : i32
    %c0_i32_0 = arith.constant 0 : i32
    %c0_i32_1 = arith.constant 0 : i32
    return %c0_i32, %c0_i32_0 : i32, i32
  }
  func.func @transform_3(%arg0: i32) -> (i32, i32) {
    %c0_i32 = arith.constant 0 : i32
    %c0_i32_0 = arith.constant 0 : i32
    %c0_i32_1 = arith.constant 0 : i32
    return %c0_i32, %c0_i32_0 : i32, i32
  }
  func.func @transform_4(%arg0: i32) -> (i32, i32, i32) {
    %c0_i32 = arith.constant 0 : i32
    %c0_i32_0 = arith.constant 0 : i32
    %c0_i32_1 = arith.constant 0 : i32
    return %arg0, %c0_i32, %c0_i32_0 : i32, i32, i32
  }
  func.func @transform_5(%arg0: i32) -> (i32, i32, i32) {
    %c0_i32 = arith.constant 0 : i32
    %c0_i32_0 = arith.constant 0 : i32
    %c0_i32_1 = arith.constant 0 : i32
    return %arg0, %c0_i32, %c0_i32_0 : i32, i32, i32
  }
  func.func @transform_6(%arg0: i32) -> (i32, i32, i32) {
    %c0_i32 = arith.constant 0 : i32
    %c0_i32_0 = arith.constant 0 : i32
    %c0_i32_1 = arith.constant 0 : i32
    return %arg0, %c0_i32, %c0_i32_0 : i32, i32, i32
  }
  func.func @transform_7(%arg0: i32) -> (i32, i32, i32) {
    %c0_i32 = arith.constant 0 : i32
    %c0_i32_0 = arith.constant 0 : i32
    %c0_i32_1 = arith.constant 0 : i32
    return %arg0, %c0_i32, %c0_i32_0 : i32, i32, i32
  }
}

</mosaic_0001>

<llo_original>
// kernel: tpu_custom_call.1
$region0: #{tpu_custom_call.1}
  #allocation0 [shape = 'u32[]', space=smem, size = 0x4, offset = 0x4, fixed_abs, tag = 'smem constant byte address 0x4 - core index']
  #allocation1 [shape = 'u32[144,128]{1,0:T(1,128)}', space=vmem, size = 0x12000, scoped, tag = 'internal scratch']
  %s0 = inlined_call_operand.vmem [shape: f32[4,128], index: 0, kind: input, shape index: {}]
  %s1 = inlined_call_operand.vmem [shape: f32[4,128], index: 1, kind: input, shape index: {}]
  %s2 = inlined_call_operand.vmem [shape: f32[4,128], index: 2, kind: input, shape index: {}]
  %s3 = inlined_call_operand.vmem [shape: f32[4,128], index: 3, kind: input, shape index: {}]
  %s4 = inlined_call_operand.vmem [shape: f32[4,11,128], index: 4, kind: input, shape index: {}]
  %s5 = inlined_call_operand.hbm [shape: f32[4,16,128], index: 5, kind: output, shape index: {0}]
  %s6 = inlined_call_operand.hbm [shape: f32[4,16,128], index: 6, kind: output, shape index: {1}]
  %s7 = inlined_call_operand.hbm [shape: f32[4,16,128], index: 7, kind: output, shape index: {2}]
  %8 = xla_tuple %s5, %s6, %s7
  %s9 = sld [smem:[#allocation0]]
  $region69: #{tpu_custom_call.1} parent=0
    _
  %s11 = ssub.s32 1, %s9
  %s12 = scalar_select 0, %s11, %s9
  $region1: #{tpu_custom_call.1} parent=0
    #allocation2 [shape = 'u8[32768]{0}', space=vmem, size = 0x8000, scoped, tag = 'output window, operand 0']
    #allocation3 [shape = 's32[2]{0}', space=sflag, size = 0x8, scoped, tag = 'scoped memory for tpu_custom_call.1']
    #allocation4 [shape = 'u8[32768]{0}', space=vmem, size = 0x8000, scoped, tag = 'output window, operand 1']
    #allocation5 [shape = 's32[2]{0}', space=sflag, size = 0x8, scoped, tag = 'scoped memory for tpu_custom_call.1']
    #allocation6 [shape = 'u8[32768]{0}', space=vmem, size = 0x8000, scoped, tag = 'output window, operand 2']
    %13 = vsyncpa [#allocation3], 0
    %s14 = scalar_lea.sflag [#allocation3], 1
    %15 = vsyncpa %s14, 0
    %16 = vsyncpa [#allocation5], 0
    %s17 = scalar_lea.sflag [#allocation5], 1
    %18 = vsyncpa %s17, 0
    loop: start=0, step=1, limit=4
    $region2: #{tpu_custom_call.1} parent=1 // loop_pre_header
      _
    $region3: #{tpu_custom_call.1} parent=1 // loop_header
      %s20 = sphi 0, %s24
      %p21 = scmp.ge.s32.totalorder %s20, 4
      %s28 = sphi 0, %s28
      %s30 = sphi 0, %s28
      %s31 = sphi 0, %s30
      %s45 = sphi 0, %s31
      %s49 = sphi 0, %s49
      %s51 = sphi 0, %s49
      %s52 = sphi 0, %s51
      %s66 = sphi 0, %s52
      %s70 = sphi 0, %s70
      %s72 = sphi 0, %s70
      %s73 = sphi 0, %s72
      %s87 = sphi 0, %s73
      %s91 = sphi 0, %s91
      %s93 = sphi 0, %s91
      %s94 = sphi 0, %s93
      %s108 = sphi 0, %s94
      %s114 = sphi 0, %s116
      %s117 = sphi 0, %s114
      %s118 = sphi 0, %s117
      %s134 = sphi 0, %s118
      %s140 = sphi 0, %s142
      %s143 = sphi 0, %s140
      %s144 = sphi 0, %s143
      %s160 = sphi 0, %s144
      %s166 = sphi 0, %s168
      %s169 = sphi 0, %s166
      %s170 = sphi 0, %s169
      %s186 = sphi 0, %s170
      %s192 = sphi 0, %s194
      %s195 = sphi 0, %s192
      %s196 = sphi 0, %s195
      %s212 = sphi 0, %s196
    $region4: #{tpu_custom_call.1} parent=1 // loop_header_branch
      %23 = sbr.rel (%p21) target = $region8
    $region5: #{tpu_custom_call.1} parent=1 // loop_body
      %s25 = ssub.s32 %s20, 1
      %s26 = ssub.s32 %s20, 2
      %s27 = sadd.s32 %s20, 1
      %s29 = sadd.s32 %s28, 1
      %p32 = scmp.eq.s32.totalorder %s20, 1
      %p33 = scmp.ne.s32.totalorder %s28, %s30
      %p34 = scmp.eq.s32.totalorder %s20, 0
      %p35 = por %p33, %p34
      %p36 = scmp.ne.s32.totalorder %s28, %s30
      %p37 = scmp.eq.s32.totalorder %s25, 1
      %p38 = por %p36, %p37
      %p39 = scmp.ne.s32.totalorder %s30, %s31
      %p40 = scmp.eq.s32.totalorder %s25, 0
      %p41 = por %p39, %p40
      %p42 = scmp.ne.s32.totalorder %s30, %s31
      %p43 = scmp.eq.s32.totalorder %s26, 1
      %p44 = por %p42, %p43
      %p46 = scmp.ne.s32.totalorder %s31, %s45
      %p47 = scmp.eq.s32.totalorder %s26, 0
      %p48 = por %p46, %p47
      %s50 = sadd.s32 %s49, 1
      %p53 = scmp.eq.s32.totalorder %s20, 1
      %p54 = scmp.ne.s32.totalorder %s49, %s51
      %p55 = scmp.eq.s32.totalorder %s20, 0
      %p56 = por %p54, %p55
      %p57 = scmp.ne.s32.totalorder %s49, %s51
      %p58 = scmp.eq.s32.totalorder %s25, 1
      %p59 = por %p57, %p58
      %p60 = scmp.ne.s32.totalorder %s51, %s52
      %p61 = scmp.eq.s32.totalorder %s25, 0
      %p62 = por %p60, %p61
      %p63 = scmp.ne.s32.totalorder %s51, %s52
      %p64 = scmp.eq.s32.totalorder %s26, 1
      %p65 = por %p63, %p64
      %p67 = scmp.ne.s32.totalorder %s52, %s66
      %p68 = scmp.eq.s32.totalorder %s26, 0
      %p69 = por %p67, %p68
      %s71 = sadd.s32 %s70, 1
      %p74 = scmp.eq.s32.totalorder %s20, 1
      %p75 = scmp.ne.s32.totalorder %s70, %s72
      %p76 = scmp.eq.s32.totalorder %s20, 0
      %p77 = por %p75, %p76
      %p78 = scmp.ne.s32.totalorder %s70, %s72
      %p79 = scmp.eq.s32.totalorder %s25, 1
      %p80 = por %p78, %p79
      %p81 = scmp.ne.s32.totalorder %s72, %s73
      %p82 = scmp.eq.s32.totalorder %s25, 0
      %p83 = por %p81, %p82
      %p84 = scmp.ne.s32.totalorder %s72, %s73
      %p85 = scmp.eq.s32.totalorder %s26, 1
      %p86 = por %p84, %p85
      %p88 = scmp.ne.s32.totalorder %s73, %s87
      %p89 = scmp.eq.s32.totalorder %s26, 0
      %p90 = por %p88, %p89
      %s92 = sadd.s32 %s91, 1
      %p95 = scmp.eq.s32.totalorder %s20, 1
      %p96 = scmp.ne.s32.totalorder %s91, %s93
      %p97 = scmp.eq.s32.totalorder %s20, 0
      %p98 = por %p96, %p97
      %p99 = scmp.ne.s32.totalorder %s91, %s93
      %p100 = scmp.eq.s32.totalorder %s25, 1
      %p101 = por %p99, %p100
      %p102 = scmp.ne.s32.totalorder %s93, %s94
      %p103 = scmp.eq.s32.totalorder %s25, 0
      %p104 = por %p102, %p103
      %p105 = scmp.ne.s32.totalorder %s93, %s94
      %p106 = scmp.eq.s32.totalorder %s26, 1
      %p107 = por %p105, %p106
      %p109 = scmp.ne.s32.totalorder %s94, %s108
      %p110 = scmp.eq.s32.totalorder %s26, 0
      %p111 = por %p109, %p110
      %s112 = ssub.s32 %s20, %s27
      %p113 = scmp.eq.s32.totalorder %s112, 0
      %s115 = sadd.s32 %s114, 1
      %s116 = scalar_select %p113, %s114, %s115
      %p119 = pneg %p113
      %p120 = scmp.eq.s32.totalorder %s20, 1
      %p121 = por %p119, %p120
      %p122 = scmp.ne.s32.totalorder %s114, %s117
      %p123 = scmp.eq.s32.totalorder %s20, 0
      %p124 = por %p122, %p123
      %p125 = scmp.ne.s32.totalorder %s114, %s117
      %p126 = scmp.eq.s32.totalorder %s25, 1
      %p127 = por %p125, %p126
      %p128 = scmp.ne.s32.totalorder %s117, %s118
      %p129 = scmp.eq.s32.totalorder %s25, 0
      %p130 = por %p128, %p129
      %p131 = scmp.ne.s32.totalorder %s117, %s118
      %p132 = scmp.eq.s32.totalorder %s26, 1
      %p133 = por %p131, %p132
      %p135 = scmp.ne.s32.totalorder %s118, %s134
      %p136 = scmp.eq.s32.totalorder %s26, 0
      %p137 = por %p135, %p136
      %s138 = ssub.s32 %s20, %s27
      %p139 = scmp.eq.s32.totalorder %s138, 0
      %s141 = sadd.s32 %s140, 1
      %s142 = scalar_select %p139, %s140, %s141
      %p145 = pneg %p139
      %p146 = scmp.eq.s32.totalorder %s20, 1
      %p147 = por %p145, %p146
      %p148 = scmp.ne.s32.totalorder %s140, %s143
      %p149 = scmp.eq.s32.totalorder %s20, 0
      %p150 = por %p148, %p149
      %p151 = scmp.ne.s32.totalorder %s140, %s143
      %p152 = scmp.eq.s32.totalorder %s25, 1
      %p153 = por %p151, %p152
      %p154 = scmp.ne.s32.totalorder %s143, %s144
      %p155 = scmp.eq.s32.totalorder %s25, 0
      %p156 = por %p154, %p155
      %p157 = scmp.ne.s32.totalorder %s143, %s144
      %p158 = scmp.eq.s32.totalorder %s26, 1
      %p159 = por %p157, %p158
      %p161 = scmp.ne.s32.totalorder %s144, %s160
      %p162 = scmp.eq.s32.totalorder %s26, 0
      %p163 = por %p161, %p162
      %s164 = ssub.s32 %s20, %s27
      %p165 = scmp.eq.s32.totalorder %s164, 0
      %s167 = sadd.s32 %s166, 1
      %s168 = scalar_select %p165, %s166, %s167
      %p171 = pneg %p165
      %p172 = scmp.eq.s32.totalorder %s20, 1
      %p173 = por %p171, %p172
      %p174 = scmp.ne.s32.totalorder %s166, %s169
      %p175 = scmp.eq.s32.totalorder %s20, 0
      %p176 = por %p174, %p175
      %p177 = scmp.ne.s32.totalorder %s166, %s169
      %p178 = scmp.eq.s32.totalorder %s25, 1
      %p179 = por %p177, %p178
      %p180 = scmp.ne.s32.totalorder %s169, %s170
      %p181 = scmp.eq.s32.totalorder %s25, 0
      %p182 = por %p180, %p181
      %p183 = scmp.ne.s32.totalorder %s169, %s170
      %p184 = scmp.eq.s32.totalorder %s26, 1
      %p185 = por %p183, %p184
      %p187 = scmp.ne.s32.totalorder %s170, %s186
      %p188 = scmp.eq.s32.totalorder %s26, 0
      %p189 = por %p187, %p188
      %s190 = ssub.s32 %s20, %s27
      %p191 = scmp.eq.s32.totalorder %s190, 0
      %s193 = sadd.s32 %s192, 1
      %s194 = scalar_select %p191, %s192, %s193
      %p197 = pneg %p191
      %p198 = scmp.eq.s32.totalorder %s20, 1
      %p199 = por %p197, %p198
      %p200 = scmp.ne.s32.totalorder %s192, %s195
      %p201 = scmp.eq.s32.totalorder %s20, 0
      %p202 = por %p200, %p201
      %p203 = scmp.ne.s32.totalorder %s192, %s195
      %p204 = scmp.eq.s32.totalorder %s25, 1
      %p205 = por %p203, %p204
      %p206 = scmp.ne.s32.totalorder %s195, %s196
      %p207 = scmp.eq.s32.totalorder %s25, 0
      %p208 = por %p206, %p207
      %p209 = scmp.ne.s32.totalorder %s195, %s196
      %p210 = scmp.eq.s32.totalorder %s26, 1
      %p211 = por %p209, %p210
      %p213 = scmp.ne.s32.totalorder %s196, %s212
      %p214 = scmp.eq.s32.totalorder %s26, 0
      %p215 = por %p213, %p214
      %p216 = scmp.le.s32.totalorder 1, %s20
      %p217 = scmp.lt.s32.totalorder %s20, 3
      %p218 = pnand %p216, %p217
      %p219 = pneg %p218
      // Predicated region
      $region9: #{tpu_custom_call.1} parent=5 // pred_check
        _
      $region10: #{tpu_custom_call.1} parent=5 // pred_check_branch
        %221 = sbr.rel (%p218) target = $region12
      $region11: #{tpu_custom_call.1} parent=5 // pred_region
        %s222 = ssub.s32 %s20, 1
        // Predicated region
        $region13: #{tpu_custom_call.1} parent=11 // pred_check
          %p223 = pneg %p41
        $region14: #{tpu_custom_call.1} parent=11 // pred_check_branch
          %225 = sbr.rel (%p223) target = $region16
        $region15: #{tpu_custom_call.1} parent=11 // pred_region
          _
        $region16: #{tpu_custom_call.1} parent=11 // pred_fallthru
          _
        // Predicated region
        $region17: #{tpu_custom_call.1} parent=11 // pred_check
          %p226 = pneg %p62
        $region18: #{tpu_custom_call.1} parent=11 // pred_check_branch
          %228 = sbr.rel (%p226) target = $region20
        $region19: #{tpu_custom_call.1} parent=11 // pred_region
          _
        $region20: #{tpu_custom_call.1} parent=11 // pred_fallthru
          _
        // Predicated region
        $region21: #{tpu_custom_call.1} parent=11 // pred_check
          %p229 = pneg %p83
        $region22: #{tpu_custom_call.1} parent=11 // pred_check_branch
          %231 = sbr.rel (%p229) target = $region24
        $region23: #{tpu_custom_call.1} parent=11 // pred_region
          _
        $region24: #{tpu_custom_call.1} parent=11 // pred_fallthru
          _
        // Predicated region
        $region25: #{tpu_custom_call.1} parent=11 // pred_check
          %p232 = pneg %p104
        $region26: #{tpu_custom_call.1} parent=11 // pred_check_branch
          %234 = sbr.rel (%p232) target = $region28
        $region27: #{tpu_custom_call.1} parent=11 // pred_region
          _
        $region28: #{tpu_custom_call.1} parent=11 // pred_fallthru
          _
      $region12: #{tpu_custom_call.1} parent=5 // pred_fallthru
        _
      %p235 = scmp.lt.s32.totalorder %s20, 2
      // Predicated region
      $region29: #{tpu_custom_call.1} parent=5 // pred_check
        %p236 = pneg %p235
      $region30: #{tpu_custom_call.1} parent=5 // pred_check_branch
        %238 = sbr.rel (%p236) target = $region32
      $region31: #{tpu_custom_call.1} parent=5 // pred_region
        // Predicated region
        $region33: #{tpu_custom_call.1} parent=31 // pred_check
          %p239 = pneg %p124
        $region34: #{tpu_custom_call.1} parent=31 // pred_check_branch
          %241 = sbr.rel (%p239) target = $region36
        $region35: #{tpu_custom_call.1} parent=31 // pred_region
          %s242 = smul.u32 2, %s20
          %p243 = scmp.lt.s32.totalorder %s242, 3
          %s244 = scalar_select %p243, %s242, 3
          %s245 = smul.addr %s244, 2
          %s246 = smul.addr %s245, 8
          %s247 = scalar_lea.vmem %s4, %s246
          %s248 = smul.u32 2, %s20
        $region36: #{tpu_custom_call.1} parent=31 // pred_fallthru
          _
      $region32: #{tpu_custom_call.1} parent=5 // pred_fallthru
        _
      %p249 = scmp.le.s32.totalorder 1, %s20
      %p250 = scmp.lt.s32.totalorder %s20, 3
      %p251 = pnand %p249, %p250
      %p252 = pneg %p251
      // Predicated region
      $region37: #{tpu_custom_call.1} parent=5 // pred_check
        _
      $region38: #{tpu_custom_call.1} parent=5 // pred_check_branch
        %254 = sbr.rel (%p251) target = $region40
      $region39: #{tpu_custom_call.1} parent=5 // pred_region
        %s255 = ssub.s32 %s20, 1
        %p256 = pneg %p41
        %p257 = pneg %p38
        %p258 = pneg %p62
        %p259 = pneg %p59
        %p260 = pneg %p83
        %p261 = pneg %p80
        %p262 = pneg %p104
        %p263 = pneg %p101
        %s264 = smul.u32 2, %s25
        %p265 = scmp.lt.s32.totalorder %s264, 3
        %s266 = scalar_select %p265, %s264, 3
        %s267 = smul.addr %s266, 2
        %s268 = smul.addr %s267, 8
        %s269 = scalar_lea.vmem %s4, %s268
        %p270 = pneg %p130
        %p271 = pneg %p127
        %p272 = pneg %p156
        %p273 = pneg %p153
        %s274 = sand.u32 %s143, 1
        %s275 = scalar_lea.sflag [#allocation3], %s274
        %s276 = sand.u32 %s143, 1
        %s277 = smul.addr %s276, 32
        %s278 = scalar_lea.vmem [#allocation2], %s277
        %p279 = pneg %p182
        %p280 = pneg %p179
        %s281 = sand.u32 %s25, 1
        %s282 = scalar_lea.sflag [#allocation5], %s281
        %s283 = sand.u32 %s169, 1
        %s284 = smul.addr %s283, 32
        %s285 = scalar_lea.vmem [#allocation4], %s284
        %p286 = pneg %p208
        %p287 = pneg %p205
        %s288 = sand.u32 %s25, 1
        %s289 = scalar_lea.sflag [#allocation5], %s288
        %s290 = sand.u32 %s195, 1
        %s291 = smul.addr %s290, 32
        %s292 = scalar_lea.vmem [#allocation6], %s291
        %s293 = smul.u32 2, %s25
        %p294 = scmp.lt.s32.totalorder %s293, 3
        %s295 = scalar_select %p294, %s293, 3
        %s296 = smul.addr %s295, 2
        %s297 = smul.addr %s296, 8
        %s298 = scalar_lea.vmem %s4, %s297
        %s299 = smul.u32 2, %s25
        %s300 = smul.u32 2, %s25
        %s301 = smul.u32 2, %s25
        %s302 = smul.u32 2, %s25
        %s303 = smul.u32 %s25, 2
        %s304 = scalar_lea.vmem %s0, %s303
        %v305 = vld [vmem:[%s304] sm:$0x3]
        %v308 = vunpack.c.l.s4 1966171168
        %v309 = vunpack.c.0.s8 %v308
        %v310 = vlaneseq
        %v311 = vshrl.u32 %v310, 7
        %v312 = vsub.s32 %v309, %v311
        %v313 = vrot.slane %v305, %v312
        %v314 = vcombine.high %v313, %v313
        %v316 = vunpack.c.l.s4 1966171168
        %v317 = vunpack.c.0.s8 %v316
        %v318 = vlaneseq
        %v319 = vshrl.u32 %v318, 7
        %v320 = vsub.s32 %v317, %v319
        %v321 = vrot.slane %v313, %v320
        %v323 = vunpack.c.l.s4 1966171168
        %v324 = vunpack.c.0.s8 %v323
        %v325 = vlaneseq
        %v326 = vshrl.u32 %v325, 7
        %v327 = vsub.s32 %v324, %v326
        %v328 = vrot.slane %v314, %v327
        %331 = vst [vmem:[%s278] sm:$0x1] %v321
        %332 = vst [vmem:[%s278 + $0x10] sm:$0x1] %v328
        %333 = vst [vmem:[%s285] sm:$0x1] %v321
        %334 = vst [vmem:[%s285 + $0x10] sm:$0x1] %v328
        %335 = vst [vmem:[%s292] sm:$0x1] %v321
        %336 = vst [vmem:[%s292 + $0x10] sm:$0x1] %v328
        %v337 = vld [vmem:[%s1] sm:$0xf]
        %338 = vst [vmem:[%s278 + $0x1] sm:$0xf] %v337
        %339 = vst [vmem:[%s278 + $0x11] sm:$0xf] %v337
        %v340 = vld [vmem:[%s2] sm:$0xf]
        %341 = vst [vmem:[%s285 + $0x1] sm:$0xf] %v340
        %342 = vst [vmem:[%s285 + $0x11] sm:$0xf] %v340
        %v343 = vld [vmem:[%s3] sm:$0xf]
        %344 = vst [vmem:[%s292 + $0x1] sm:$0xf] %v343
        %345 = vst [vmem:[%s292 + $0x11] sm:$0xf] %v343
        %v346 = vld [vmem:[%s298] sm:$0xff]
        %v347 = vld [vmem:[%s298 + $0x8] sm:$0x7]
        %v348 = vld [vmem:[%s298 + $0x10] sm:$0xff]
        %v349 = vld [vmem:[%s298 + $0x18] sm:$0x7]
        %350 = vst [vmem:[%s278 + $0x5] sm:$0xff] %v346
        %351 = vst [vmem:[%s278 + $0xd] sm:$0x7] %v347
        %352 = vst [vmem:[%s278 + $0x15] sm:$0xff] %v348
        %353 = vst [vmem:[%s278 + $0x1d] sm:$0x7] %v349
        %354 = vst [vmem:[%s285 + $0x5] sm:$0xff] %v346
        %355 = vst [vmem:[%s285 + $0xd] sm:$0x7] %v347
        %356 = vst [vmem:[%s285 + $0x15] sm:$0xff] %v348
        %357 = vst [vmem:[%s285 + $0x1d] sm:$0x7] %v349
        %358 = vst [vmem:[%s292 + $0x5] sm:$0xff] %v346
        %359 = vst [vmem:[%s292 + $0xd] sm:$0x7] %v347
        %360 = vst [vmem:[%s292 + $0x15] sm:$0xff] %v348
        %361 = vst [vmem:[%s292 + $0x1d] sm:$0x7] %v349
        %s362 = sand.u32 %s143, 1
        %s363 = scalar_lea.sflag [#allocation3], %s362
        %s364 = sand.u32 %s143, 1
        %s365 = smul.addr %s364, 32
        %s366 = scalar_lea.vmem [#allocation2], %s365
        %s367 = sand.u32 %s25, 1
        %s368 = scalar_lea.sflag [#allocation5], %s367
        %s369 = sand.u32 %s169, 1
        %s370 = smul.addr %s369, 32
        %s371 = scalar_lea.vmem [#allocation4], %s370
        %s372 = sand.u32 %s25, 1
        %s373 = scalar_lea.sflag [#allocation5], %s372
        %s374 = sand.u32 %s195, 1
        %s375 = smul.addr %s374, 32
        %s376 = scalar_lea.vmem [#allocation6], %s375
        // Predicated region
        $region41: #{tpu_custom_call.1} parent=39 // pred_check
          %p377 = pneg %p153
        $region42: #{tpu_custom_call.1} parent=39 // pred_check_branch
          %379 = sbr.rel (%p377) target = $region44
        $region43: #{tpu_custom_call.1} parent=39 // pred_region
          %s380 = smul.u32 2, %s25
          %s382 = ssub.s32 512, 512
          %383 = vsyncadd %s363, %s382
          %s384 = smul.addr %s380, 2
          %s385 = smul.addr %s384, 128
          %s386 = scalar_lea.hbm %s5, %s385
          %s387 = sshll.u32 %s366, 4
          %s388 = int_to_ptr.vmem [resolvable:$true] %s387
          %393 = dma.vmem_to_hbm [thread:$0]  %s388, 512, %s386, %s363, 128, 128, 8
        $region44: #{tpu_custom_call.1} parent=39 // pred_fallthru
          _
        // Predicated region
        $region45: #{tpu_custom_call.1} parent=39 // pred_check
          %p394 = pneg %p179
        $region46: #{tpu_custom_call.1} parent=39 // pred_check_branch
          %396 = sbr.rel (%p394) target = $region48
        $region47: #{tpu_custom_call.1} parent=39 // pred_region
          %s397 = smul.u32 2, %s25
          %s399 = ssub.s32 512, 512
          %400 = vsyncadd %s368, %s399
          %s401 = smul.addr %s397, 2
          %s402 = smul.addr %s401, 128
          %s403 = scalar_lea.hbm %s6, %s402
          %s404 = sshll.u32 %s371, 4
          %s405 = int_to_ptr.vmem [resolvable:$true] %s404
          %410 = dma.vmem_to_hbm [thread:$0]  %s405, 512, %s403, %s368, 128, 128, 8
        $region48: #{tpu_custom_call.1} parent=39 // pred_fallthru
          _
        // Predicated region
        $region49: #{tpu_custom_call.1} parent=39 // pred_check
          %p411 = pneg %p205
        $region50: #{tpu_custom_call.1} parent=39 // pred_check_branch
          %413 = sbr.rel (%p411) target = $region52
        $region51: #{tpu_custom_call.1} parent=39 // pred_region
          %s414 = smul.u32 2, %s25
          %s416 = ssub.s32 512, 512
          %417 = vsyncadd %s373, %s416
          %s418 = smul.addr %s414, 2
          %s419 = smul.addr %s418, 128
          %s420 = scalar_lea.hbm %s7, %s419
          %s421 = sshll.u32 %s376, 4
          %s422 = int_to_ptr.vmem [resolvable:$true] %s421
          %427 = dma.vmem_to_hbm [thread:$0]  %s422, 512, %s420, %s373, 128, 128, 8
        $region52: #{tpu_custom_call.1} parent=39 // pred_fallthru
          _
      $region40: #{tpu_custom_call.1} parent=5 // pred_fallthru
        _
      %p428 = scmp.le.s32.totalorder 2, %s20
      // Predicated region
      $region53: #{tpu_custom_call.1} parent=5 // pred_check
        %p429 = pneg %p428
      $region54: #{tpu_custom_call.1} parent=5 // pred_check_branch
        %431 = sbr.rel (%p429) target = $region56
      $region55: #{tpu_custom_call.1} parent=5 // pred_region
        %s432 = ssub.s32 %s20, 2
        // Predicated region
        $region57: #{tpu_custom_call.1} parent=55 // pred_check
          %p433 = pneg %p159
        $region58: #{tpu_custom_call.1} parent=55 // pred_check_branch
          %435 = sbr.rel (%p433) target = $region60
        $region59: #{tpu_custom_call.1} parent=55 // pred_region
          %s436 = sand.u32 %s144, 1
          %s437 = scalar_lea.sflag [#allocation3], %s436
          %s438 = sand.u32 %s144, 1
          %s439 = smul.addr %s438, 32
          %s440 = scalar_lea.vmem [#allocation2], %s439
          %441 = dma.done %s437, 512
        $region60: #{tpu_custom_call.1} parent=55 // pred_fallthru
          _
        // Predicated region
        $region61: #{tpu_custom_call.1} parent=55 // pred_check
          %p442 = pneg %p185
        $region62: #{tpu_custom_call.1} parent=55 // pred_check_branch
          %444 = sbr.rel (%p442) target = $region64
        $region63: #{tpu_custom_call.1} parent=55 // pred_region
          %s445 = sand.u32 %s26, 1
          %s446 = scalar_lea.sflag [#allocation5], %s445
          %s447 = sand.u32 %s170, 1
          %s448 = smul.addr %s447, 32
          %s449 = scalar_lea.vmem [#allocation4], %s448
          %450 = dma.done %s446, 512
        $region64: #{tpu_custom_call.1} parent=55 // pred_fallthru
          _
        // Predicated region
        $region65: #{tpu_custom_call.1} parent=55 // pred_check
          %p451 = pneg %p211
        $region66: #{tpu_custom_call.1} parent=55 // pred_check_branch
          %453 = sbr.rel (%p451) target = $region68
        $region67: #{tpu_custom_call.1} parent=55 // pred_region
          %s454 = sand.u32 %s26, 1
          %s455 = scalar_lea.sflag [#allocation5], %s454
          %s456 = sand.u32 %s196, 1
          %s457 = smul.addr %s456, 32
          %s458 = scalar_lea.vmem [#allocation6], %s457
          %459 = dma.done %s455, 512
        $region68: #{tpu_custom_call.1} parent=55 // pred_fallthru
          _
      $region56: #{tpu_custom_call.1} parent=5 // pred_fallthru
        _
    $region6: #{tpu_custom_call.1} parent=1 // loop_footer
      %s24 = sadd.s32 1, %s20
    $region7: #{tpu_custom_call.1} parent=1 // loop_footer_branch
      %19 = sbr.rel target = $region3
    $region8: #{tpu_custom_call.1} parent=1 // loop_exit
      _
    %460 = vsyncpa [#allocation3], 1
    %s461 = scalar_lea.sflag [#allocation3], 1
    %462 = vsyncpa %s461, 1
    %463 = vsyncpa [#allocation5], 1
    %s464 = scalar_lea.sflag [#allocation5], 1
    %465 = vsyncpa %s464, 1

</llo_original>
